<compile_context>
chip_gen: v6e
topology: v6e:2x2x1
jax: 0.10.0
libtpu: 0.0.40
codegen_flags: <defaults>
</compile_context>

<pallas_src>
import math

import jax
import jax.numpy as jnp
from jax.experimental import pallas as pl
from jax.experimental.pallas import tpu as pltpu

CHANNELS = 3                 # RGB
_CHAIN_TARGET_LANES = 8192   # ~2.8 MiB f32 I/O per chain grid step
_CONV_TARGET_LANES = 16384   # ~2.8 MiB f32 I/O per conv grid step


# --------------------------- Pallas kernels ---------------------------------

def _frgb_chain_kernel(xs_ref, xl_ref, hm_ref, wy_ref, b_ref, xout_ref, y_ref):
    """(upWT -> bilinear down-2 -> downWT -> equalized 1x1 conv + bias + x_last)
    collapsed to two feature-major matmuls against tiny constant weights."""
    xs = xs_ref[0].astype(jnp.float32)                       # (4C, TP)
    # xout = Hm @ Xs  (Haar mix of the LL subband, 0.5*forward_haar folded into Hm)
    xout_ref[0] = jnp.dot(hm_ref[...], xs,
                          preferred_element_type=jnp.float32).astype(xout_ref.dtype)
    # y = (Wc @ Hm) @ Xs + bias + x_last   (conv scale folded into wy in the wrapper)
    y = jnp.dot(wy_ref[...], xs, preferred_element_type=jnp.float32)
    y_ref[0] = (y + b_ref[...] + xl_ref[0].astype(jnp.float32)).astype(y_ref.dtype)


def _conv1x1_kernel(x_ref, w_ref, b_ref, y_ref):
    """Equalized-lr 1x1 conv (scale already folded into w) + bias, feature-major."""
    y = jnp.dot(w_ref[...], x_ref[0].astype(jnp.float32),
                preferred_element_type=jnp.float32)
    y_ref[0] = (y + b_ref[...]).astype(y_ref.dtype)


# --------------------------- wrapper (glue) ----------------------------------

def _pick_tp(P, N, target):
    """Spatial (lane) tile: multiple of 128 dividing P (or the full extent),
    sized for ~target lanes per step, with >= 2 total grid steps when possible."""
    if P % 128 != 0:
        return P                                   # full-extent block (legal fallback)
    tp = P
    while tp > target and tp % 256 == 0:
        tp //= 2
    if N * (P // tp) < 2 and tp % 256 == 0:        # keep both v7x TensorCores busy
        tp //= 2
    return tp


def _haar_mix_matrix(C):
    # xout[band*C + c] = sum_s A[band, s] * ll_s2d[s*C + c],  s = sy*2 + sx
    # (forward Haar of 0.5*LL; the 0.5 from the avg-pool is folded into the 0.25)
    A = 0.25 * jnp.array([[1.,  1.,  1.,  1.],
                          [1.,  1., -1., -1.],
                          [1., -1.,  1., -1.],
                          [1., -1., -1.,  1.]], dtype=jnp.float32)    # (band, s)
    return jnp.kron(A, jnp.eye(C, dtype=jnp.float32))                  # (4C, 4C)


def frgb_forward(x, w, bias, x_last=None, io_dtype=jnp.float32):
    """x: (N,4C,H,W) NCHW; w: (fo,4C); bias: (fo,); x_last: (N,fo,H//2,W//2) or None.
    io_dtype controls the dtype of the large kernel I/O tensors (f32 or bf16);
    compute/accumulation is always f32."""
    N, C4, H, W = x.shape
    fo = w.shape[0]
    scale = 1.0 / math.sqrt(C4)                      # equalized-lr scale for a 1x1 conv
    wc = (w.astype(jnp.float32) * scale)             # (fo, 4C), scale folded once
    bias2 = bias.astype(jnp.float32).reshape(fo, 1)  # broadcast over lanes in-kernel
    itemsize = jnp.dtype(io_dtype).itemsize

    if x_last is None:
        # y = equalized 1x1 conv(x); x is returned unchanged. NCHW is already
        # feature-major, so there are no transposes or pads at all.
        P = H * W
        TP = _pick_tp(P, N, _CONV_TARGET_LANES)
        xf = x.reshape(N, C4, P).astype(io_dtype)

        cost = pl.CostEstimate(
            flops=2 * N * P * C4 * fo + N * P * fo,
            transcendentals=0,
            bytes_accessed=N * P * (C4 + fo) * itemsize + fo * C4 * 4 + fo * 4)

        y = pl.pallas_call(
            _conv1x1_kernel,
            out_shape=jax.ShapeDtypeStruct((N, fo, P), io_dtype),
            grid_spec=pltpu.PrefetchScalarGridSpec(
                num_scalar_prefetch=0,
                grid=(N, P // TP),
                in_specs=[
                    pl.BlockSpec((1, C4, TP), lambda n, p: (n, 0, p)),
                    pl.BlockSpec((fo, C4), lambda n, p: (0, 0)),
                    pl.BlockSpec((fo, 1), lambda n, p: (0, 0)),
                ],
                out_specs=pl.BlockSpec((1, fo, TP), lambda n, p: (n, 0, p)),
            ),
            compiler_params=pltpu.CompilerParams(
                dimension_semantics=("parallel", "parallel")),
            cost_estimate=cost,
        )(xf, wc, bias2)
        return x, y.reshape(N, fo, H, W)

    # ---- chain path: upWT -> bilinear down-2 -> downWT -> 1x1 conv (+ x_last) ----
    C = C4 // 4
    Ho, Wo = H // 2, W // 2
    P = Ho * Wo
    TP = _pick_tp(P, N, _CHAIN_TARGET_LANES)

    # LL-only space-to-depth, feature-major: rows = (sy, sx, c), lanes = Ho*Wo.
    ll = x[:, :C].astype(jnp.float32)                                   # (N, C, H, W)
    xs = ll.reshape(N, C, Ho, 2, Wo, 2)
    xs = jnp.transpose(xs, (0, 3, 5, 1, 2, 4)).reshape(N, C4, P).astype(io_dtype)
    xl = x_last.reshape(N, fo, P).astype(io_dtype)        # NCHW == feature-major already

    hm = _haar_mix_matrix(C)                              # (4C, 4C): xout = hm @ xs
    wy = wc @ hm                                          # (fo, 4C): Haar + conv folded

    cost = pl.CostEstimate(
        flops=2 * N * P * (C4 * C4 + C4 * fo) + 2 * N * P * fo,
        transcendentals=0,
        bytes_accessed=(N * P * (2 * C4 + 2 * fo) * itemsize
                        + (C4 * C4 + fo * C4 + fo) * 4))

    xout, y = pl.pallas_call(
        _frgb_chain_kernel,
        out_shape=(jax.ShapeDtypeStruct((N, C4, P), io_dtype),
                   jax.ShapeDtypeStruct((N, fo, P), io_dtype)),
        grid_spec=pltpu.PrefetchScalarGridSpec(
            num_scalar_prefetch=0,
            grid=(N, P // TP),
            in_specs=[
                pl.BlockSpec((1, C4, TP), lambda n, p: (n, 0, p)),   # xs (LL s2d)
                pl.BlockSpec((1, fo, TP), lambda n, p: (n, 0, p)),   # x_last
                pl.BlockSpec((C4, C4), lambda n, p: (0, 0)),         # hm (resident)
                pl.BlockSpec((fo, C4), lambda n, p: (0, 0)),         # wy (resident)
                pl.BlockSpec((fo, 1), lambda n, p: (0, 0)),          # bias (resident)
            ],
            out_specs=(pl.BlockSpec((1, C4, TP), lambda n, p: (n, 0, p)),
                       pl.BlockSpec((1, fo, TP), lambda n, p: (n, 0, p))),
        ),
        compiler_params=pltpu.CompilerParams(
            dimension_semantics=("parallel", "parallel")),
        cost_estimate=cost,
    )(xs, xl, hm, wy, bias2)

    return xout.reshape(N, C4, Ho, Wo), y.reshape(N, fo, Ho, Wo)


# --------------------------- pure-JAX reference ------------------------------

def _haar_forward_ref(x):
    N, C, H, W = x.shape
    xr = x.reshape(N, C, H // 2, 2, W // 2, 2)
    a = xr[:, :, :, 0, :, 0]; b = xr[:, :, :, 0, :, 1]
    c = xr[:, :, :, 1, :, 0]; d = xr[:, :, :, 1, :, 1]
    ll = 0.5 * (a + b + c + d)
    lh = 0.5 * (a + b - c - d)
    hl = 0.5 * (a - b + c - d)
    hh = 0.5 * (a - b - c + d)
    return jnp.concatenate([ll, lh, hl, hh], axis=1)


def _haar_inverse_ref(x):
    N, C4, H, W = x.shape
    C = C4 // 4
    ll, lh, hl, hh = jnp.split(x, 4, axis=1)
    oa = 0.5 * (ll - lh - hl + hh)
    ob = 0.5 * (ll - lh + hl - hh)
    oc = 0.5 * (ll + lh - hl - hh)
    od = 0.5 * (ll + lh + hl + hh)
    blk = jnp.stack([jnp.stack([oa, ob], axis=-1),
                     jnp.stack([oc, od], axis=-1)], axis=-2)     # (N,C,H,W,2,2)
    return jnp.transpose(blk, (0, 1, 2, 4, 3, 5)).reshape(N, C, 2 * H, 2 * W)


def _frgb_ref(x, w, bias, x_last=None):
    C4 = x.shape[1]
    scale = 1.0 / math.sqrt(C4)
    if x_last is not None:
        x = _haar_inverse_ref(x)
        N, C, H2, W2 = x.shape
        x = x.reshape(N, C, H2 // 2, 2, W2 // 2, 2).mean(axis=(3, 5))  # bilinear down-2
        x = _haar_forward_ref(x)
    y = jnp.einsum('nchw,fc->nfhw', x, w) * scale + bias[None, :, None, None]
    if x_last is not None:
        y = y + x_last
    return x, y


# ------------------------------- main -----------------------------------------

if __name__ == "__main__":
    key = jax.random.PRNGKey(0)
    fo = 32
    C4 = CHANNELS * 4  # wavelet-decomposed RGB -> 12 channels

    # small shape (single spatial tile per image) + larger shape (multiple grid steps)
    for (N, H, W) in [(2, 16, 16), (2, 128, 128)]:
        k1, k2, k3, k4, key = jax.random.split(key, 5)
        x = jax.random.normal(k1, (N, C4, H, W), dtype=jnp.float32)
        x_last = jax.random.normal(k2, (N, fo, H // 2, W // 2), dtype=jnp.float32)
        w = jax.random.normal(k3, (fo, C4), dtype=jnp.float32)   # EqualConv2d-style 1x1 weight
        bias = 0.1 * jax.random.normal(k4, (fo,), dtype=jnp.float32)

        xo_r, y_r = _frgb_ref(x, w, bias, x_last)
        xo2_r, y2_r = _frgb_ref(x, w, bias, None)

        # f32 I/O path (exact vs reference): upWT -> down-2 -> downWT -> conv -> + x_last
        xo, y = frgb_forward(x, w, bias, x_last)
        jax.block_until_ready((xo, y))
        assert xo.shape == (N, C4, H // 2, W // 2) and y.shape == (N, fo, H // 2, W // 2)
        assert jnp.allclose(xo, xo_r, atol=1e-4, rtol=1e-4)
        assert jnp.allclose(y, y_r, atol=1e-4, rtol=1e-4)

        # path without x_last: just the equalized 1x1 conv
        xo2, y2 = frgb_forward(x, w, bias, None)
        jax.block_until_ready((xo2, y2))
        assert jnp.allclose(xo2, xo2_r, atol=1e-4, rtol=1e-4)
        assert jnp.allclose(y2, y2_r, atol=1e-4, rtol=1e-4)

        # bf16 I/O variant (halves HBM traffic on v6e/v7x, f32 accumulation): loose tolerance
        xob, yb = frgb_forward(x, w, bias, x_last, io_dtype=jnp.bfloat16)
        jax.block_until_ready((xob, yb))
        assert jnp.allclose(xob.astype(jnp.float32), xo_r, atol=1e-1, rtol=5e-2)
        assert jnp.allclose(yb.astype(jnp.float32), y_r, atol=1e-1, rtol=5e-2)

        _, yb2 = frgb_forward(x, w, bias, None, io_dtype=jnp.bfloat16)
        jax.block_until_ready(yb2)
        assert jnp.allclose(yb2.astype(jnp.float32), y2_r, atol=1e-1, rtol=5e-2)

    print("KERNEL_OK")
</pallas_src>

<mosaic_0001>
module attributes {stable_mosaic.version = 11 : i64} {
  func.func @_frgb_chain_kernel(%arg0: i32, %arg1: i32, %arg2: memref<1x12x64xf32, #tpu.memory_space<vmem>>, %arg3: memref<1x32x64xf32, #tpu.memory_space<vmem>>, %arg4: memref<12x12xf32, #tpu.memory_space<vmem>>, %arg5: memref<32x12xf32, #tpu.memory_space<vmem>>, %arg6: memref<32x1xf32, #tpu.memory_space<vmem>>, %arg7: memref<1x12x64xf32, #tpu.memory_space<vmem>>, %arg8: memref<1x32x64xf32, #tpu.memory_space<vmem>>) attributes {dimension_semantics = [#tpu.dimension_semantics<parallel>, #tpu.dimension_semantics<parallel>], iteration_bounds = array<i64: 2, 1>, scalar_prefetch = 0 : i64, scratch_operands = 0 : i64, tpu.core_type = #tpu.core_type<tc>, window_params = [{transform_indices = @transform_0, window_bounds = array<i64: 1, 12, 64>}, {transform_indices = @transform_1, window_bounds = array<i64: 1, 32, 64>}, {pipeline_mode = #tpu.pipeline_mode<synchronous>, transform_indices = @transform_2, window_bounds = array<i64: 12, 12>}, {pipeline_mode = #tpu.pipeline_mode<synchronous>, transform_indices = @transform_3, window_bounds = array<i64: 32, 12>}, {pipeline_mode = #tpu.pipeline_mode<synchronous>, transform_indices = @transform_4, window_bounds = array<i64: 32, 1>}, {transform_indices = @transform_5, window_bounds = array<i64: 1, 12, 64>}, {transform_indices = @transform_6, window_bounds = array<i64: 1, 32, 64>}]} {
    %c0 = arith.constant 0 : index
    %c0_0 = arith.constant 0 : index
    %c0_1 = arith.constant 0 : index
    %0 = vector.load %arg2[%c0, %c0_0, %c0_1] : memref<1x12x64xf32, #tpu.memory_space<vmem>>, vector<1x12x64xf32>
    %1 = vector.shape_cast %0 : vector<1x12x64xf32> to vector<12x64xf32>
    %c0_2 = arith.constant 0 : index
    %c0_3 = arith.constant 0 : index
    %2 = vector.load %arg4[%c0_2, %c0_3] : memref<12x12xf32, #tpu.memory_space<vmem>>, vector<12x12xf32>
    %cst = arith.constant dense<0.000000e+00> : vector<12x64xf32>
    %3 = tpu.matmul %2, %1, %cst {dimension_numbers = #tpu.dot_dimension_numbers<[1], [0], [0], [1], [0, 0, 1, 1], [], []>} : vector<12x12xf32>, vector<12x64xf32>, vector<12x64xf32> -> vector<12x64xf32>
    %c0_4 = arith.constant 0 : index
    %c0_5 = arith.constant 0 : index
    %c0_6 = arith.constant 0 : index
    %4 = vector.load %arg7[%c0_4, %c0_5, %c0_6] : memref<1x12x64xf32, #tpu.memory_space<vmem>>, vector<1x12x64xf32>
    %5 = vector.shape_cast %4 : vector<1x12x64xf32> to vector<12x64xf32>
    %6 = vector.shape_cast %3 : vector<12x64xf32> to vector<1x12x64xf32>
    tpu.vector_store %arg7[%c0_4, %c0_5, %c0_6], %6 {strides = array<i32>} : memref<1x12x64xf32, #tpu.memory_space<vmem>>, vector<1x12x64xf32>,
    %c0_7 = arith.constant 0 : index
    %c0_8 = arith.constant 0 : index
    %7 = vector.load %arg5[%c0_7, %c0_8] : memref<32x12xf32, #tpu.memory_space<vmem>>, vector<32x12xf32>
    %cst_9 = arith.constant dense<0.000000e+00> : vector<32x64xf32>
    %8 = tpu.matmul %7, %1, %cst_9 {dimension_numbers = #tpu.dot_dimension_numbers<[1], [0], [0], [1], [0, 0, 1, 1], [], []>} : vector<32x12xf32>, vector<12x64xf32>, vector<32x64xf32> -> vector<32x64xf32>
    %c0_10 = arith.constant 0 : index
    %c0_11 = arith.constant 0 : index
    %9 = vector.load %arg6[%c0_10, %c0_11] : memref<32x1xf32, #tpu.memory_space<vmem>>, vector<32x1xf32>
    %10 = vector.broadcast %9 : vector<32x1xf32> to vector<32x64xf32>
    %11 = arith.addf %8, %10 : vector<32x64xf32>
    %c0_12 = arith.constant 0 : index
    %c0_13 = arith.constant 0 : index
    %c0_14 = arith.constant 0 : index
    %12 = vector.load %arg3[%c0_12, %c0_13, %c0_14] : memref<1x32x64xf32, #tpu.memory_space<vmem>>, vector<1x32x64xf32>
    %13 = vector.shape_cast %12 : vector<1x32x64xf32> to vector<32x64xf32>
    %14 = arith.addf %11, %13 : vector<32x64xf32>
    %c0_15 = arith.constant 0 : index
    %c0_16 = arith.constant 0 : index
    %c0_17 = arith.constant 0 : index
    %15 = vector.load %arg8[%c0_15, %c0_16, %c0_17] : memref<1x32x64xf32, #tpu.memory_space<vmem>>, vector<1x32x64xf32>
    %16 = vector.shape_cast %15 : vector<1x32x64xf32> to vector<32x64xf32>
    %17 = vector.shape_cast %14 : vector<32x64xf32> to vector<1x32x64xf32>
    tpu.vector_store %arg8[%c0_15, %c0_16, %c0_17], %17 {strides = array<i32>} : memref<1x32x64xf32, #tpu.memory_space<vmem>>, vector<1x32x64xf32>,
    return
  }
  func.func @transform_0(%arg0: i32, %arg1: i32) -> (i32, i32, i32) {
    %c0_i32 = arith.constant 0 : i32
    %c0_i32_0 = arith.constant 0 : i32
    return %arg0, %c0_i32, %arg1 : i32, i32, i32
  }
  func.func @transform_1(%arg0: i32, %arg1: i32) -> (i32, i32, i32) {
    %c0_i32 = arith.constant 0 : i32
    %c0_i32_0 = arith.constant 0 : i32
    return %arg0, %c0_i32, %arg1 : i32, i32, i32
  }
  func.func @transform_2(%arg0: i32, %arg1: i32) -> (i32, i32) {
    %c0_i32 = arith.constant 0 : i32
    %c0_i32_0 = arith.constant 0 : i32
    %c0_i32_1 = arith.constant 0 : i32
    return %c0_i32, %c0_i32_0 : i32, i32
  }
  func.func @transform_3(%arg0: i32, %arg1: i32) -> (i32, i32) {
    %c0_i32 = arith.constant 0 : i32
    %c0_i32_0 = arith.constant 0 : i32
    %c0_i32_1 = arith.constant 0 : i32
    return %c0_i32, %c0_i32_0 : i32, i32
  }
  func.func @transform_4(%arg0: i32, %arg1: i32) -> (i32, i32) {
    %c0_i32 = arith.constant 0 : i32
    %c0_i32_0 = arith.constant 0 : i32
    %c0_i32_1 = arith.constant 0 : i32
    return %c0_i32, %c0_i32_0 : i32, i32
  }
  func.func @transform_5(%arg0: i32, %arg1: i32) -> (i32, i32, i32) {
    %c0_i32 = arith.constant 0 : i32
    %c0_i32_0 = arith.constant 0 : i32
    return %arg0, %c0_i32, %arg1 : i32, i32, i32
  }
  func.func @transform_6(%arg0: i32, %arg1: i32) -> (i32, i32, i32) {
    %c0_i32 = arith.constant 0 : i32
    %c0_i32_0 = arith.constant 0 : i32
    return %arg0, %c0_i32, %arg1 : i32, i32, i32
  }
}

</mosaic_0001>

<llo_original>
// kernel: tpu_custom_call.1
$region0: #{tpu_custom_call.1}
  #allocation0 [shape = 'u32[]', space=smem, size = 0x4, offset = 0x4, fixed_abs, tag = 'smem constant byte address 0x4 - core index']
  #allocation1 [shape = 'u32[144,128]{1,0:T(1,128)}', space=vmem, size = 0x12000, scoped, tag = 'internal scratch']
  %s0 = inlined_call_operand.vmem [shape: f32[2,12,64], index: 0, kind: input, shape index: {}]
  %s1 = inlined_call_operand.vmem [shape: f32[2,32,64], index: 1, kind: input, shape index: {}]
  %s2 = inlined_call_operand.vmem [shape: f32[12,12], index: 2, kind: input, shape index: {}]
  %s3 = inlined_call_operand.vmem [shape: f32[32,12], index: 3, kind: input, shape index: {}]
  %s4 = inlined_call_operand.vmem [shape: f32[32,1], index: 4, kind: input, shape index: {}]
  %s5 = inlined_call_operand.vmem [shape: f32[2,12,64], index: 5, kind: output, shape index: {0}]
  %s6 = inlined_call_operand.hbm [shape: f32[2,32,64], index: 6, kind: output, shape index: {1}]
  %7 = xla_tuple %s5, %s6
  %s8 = sld [smem:[#allocation0]]
  $region61: #{tpu_custom_call.1} parent=0
    _
  %s10 = ssub.s32 1, %s8
  %s11 = scalar_select 0, %s10, %s8
  $region1: #{tpu_custom_call.1} parent=0
    #allocation2 [shape = 'u8[32768]{0}', space=vmem, size = 0x8000, scoped, tag = 'output window, operand 1']
    #allocation3 [shape = 's32[2]{0}', space=sflag, size = 0x8, scoped, tag = 'scoped memory for tpu_custom_call.1']
    %12 = vsyncpa [#allocation3], 0
    %s13 = scalar_lea.sflag [#allocation3], 1
    %14 = vsyncpa %s13, 0
    loop: start=0, step=1, limit=4
    $region2: #{tpu_custom_call.1} parent=1 // loop_pre_header
      _
    $region3: #{tpu_custom_call.1} parent=1 // loop_header
      %s16 = sphi 0, %s20
      %p17 = scmp.ge.s32.totalorder %s16, 4
      %s23 = sphi 0, %s35
      %s24 = sphi 0, %s31
      %s25 = sphi 0, %s23
      %s26 = sphi 0, %s24
      %s27 = sphi 0, %s25
      %s28 = sphi 0, %s26
      %s40 = sphi 0, %s42
      %s43 = sphi 0, %s40
      %s44 = sphi 0, %s43
      %s60 = sphi 0, %s44
      %s68 = sphi 0, %s70
      %s71 = sphi 0, %s68
      %s72 = sphi 0, %s71
      %s88 = sphi 0, %s72
      %s92 = sphi 0, %s92
      %s94 = sphi 0, %s92
      %s95 = sphi 0, %s94
      %s109 = sphi 0, %s95
      %s113 = sphi 0, %s113
      %s115 = sphi 0, %s113
      %s116 = sphi 0, %s115
      %s130 = sphi 0, %s116
      %s134 = sphi 0, %s134
      %s136 = sphi 0, %s134
      %s137 = sphi 0, %s136
      %s151 = sphi 0, %s137
      %s159 = sphi 0, %s161
      %s162 = sphi 0, %s159
      %s163 = sphi 0, %s162
      %s179 = sphi 0, %s163
      %s187 = sphi 0, %s189
      %s190 = sphi 0, %s187
      %s191 = sphi 0, %s190
      %s207 = sphi 0, %s191
    $region4: #{tpu_custom_call.1} parent=1 // loop_header_branch
      %19 = sbr.rel (%p17) target = $region8
    $region5: #{tpu_custom_call.1} parent=1 // loop_body
      %s21 = ssub.s32 %s16, 1
      %s22 = ssub.s32 %s16, 2
      %s29 = sadd.s32 1, %s24
      %p30 = scmp.ge.s32.totalorder %s29, 1
      %s31 = scalar_select %p30, 0, %s29
      %s32 = sadd.s32 1, %s23
      %s33 = scalar_select %p30, %s32, %s23
      %p34 = scmp.ge.s32.totalorder %s33, 2
      %s35 = scalar_select %p34, 0, %s33
      %s36 = ssub.s32 %s23, %s35
      %s37 = ssub.s32 %s24, %s31
      %s38 = sor.u32 %s36, %s37
      %p39 = scmp.eq.s32.totalorder %s38, 0
      %s41 = sadd.s32 %s40, 1
      %s42 = scalar_select %p39, %s40, %s41
      %p45 = pneg %p39
      %p46 = scmp.eq.s32.totalorder %s16, 1
      %p47 = por %p45, %p46
      %p48 = scmp.ne.s32.totalorder %s40, %s43
      %p49 = scmp.eq.s32.totalorder %s16, 0
      %p50 = por %p48, %p49
      %p51 = scmp.ne.s32.totalorder %s40, %s43
      %p52 = scmp.eq.s32.totalorder %s21, 1
      %p53 = por %p51, %p52
      %p54 = scmp.ne.s32.totalorder %s43, %s44
      %p55 = scmp.eq.s32.totalorder %s21, 0
      %p56 = por %p54, %p55
      %p57 = scmp.ne.s32.totalorder %s43, %s44
      %p58 = scmp.eq.s32.totalorder %s22, 1
      %p59 = por %p57, %p58
      %p61 = scmp.ne.s32.totalorder %s44, %s60
      %p62 = scmp.eq.s32.totalorder %s22, 0
      %p63 = por %p61, %p62
      %s64 = ssub.s32 %s23, %s35
      %s65 = ssub.s32 %s24, %s31
      %s66 = sor.u32 %s64, %s65
      %p67 = scmp.eq.s32.totalorder %s66, 0
      %s69 = sadd.s32 %s68, 1
      %s70 = scalar_select %p67, %s68, %s69
      %p73 = pneg %p67
      %p74 = scmp.eq.s32.totalorder %s16, 1
      %p75 = por %p73, %p74
      %p76 = scmp.ne.s32.totalorder %s68, %s71
      %p77 = scmp.eq.s32.totalorder %s16, 0
      %p78 = por %p76, %p77
      %p79 = scmp.ne.s32.totalorder %s68, %s71
      %p80 = scmp.eq.s32.totalorder %s21, 1
      %p81 = por %p79, %p80
      %p82 = scmp.ne.s32.totalorder %s71, %s72
      %p83 = scmp.eq.s32.totalorder %s21, 0
      %p84 = por %p82, %p83
      %p85 = scmp.ne.s32.totalorder %s71, %s72
      %p86 = scmp.eq.s32.totalorder %s22, 1
      %p87 = por %p85, %p86
      %p89 = scmp.ne.s32.totalorder %s72, %s88
      %p90 = scmp.eq.s32.totalorder %s22, 0
      %p91 = por %p89, %p90
      %s93 = sadd.s32 %s92, 1
      %p96 = scmp.eq.s32.totalorder %s16, 1
      %p97 = scmp.ne.s32.totalorder %s92, %s94
      %p98 = scmp.eq.s32.totalorder %s16, 0
      %p99 = por %p97, %p98
      %p100 = scmp.ne.s32.totalorder %s92, %s94
      %p101 = scmp.eq.s32.totalorder %s21, 1
      %p102 = por %p100, %p101
      %p103 = scmp.ne.s32.totalorder %s94, %s95
      %p104 = scmp.eq.s32.totalorder %s21, 0
      %p105 = por %p103, %p104
      %p106 = scmp.ne.s32.totalorder %s94, %s95
      %p107 = scmp.eq.s32.totalorder %s22, 1
      %p108 = por %p106, %p107
      %p110 = scmp.ne.s32.totalorder %s95, %s109
      %p111 = scmp.eq.s32.totalorder %s22, 0
      %p112 = por %p110, %p111
      %s114 = sadd.s32 %s113, 1
      %p117 = scmp.eq.s32.totalorder %s16, 1
      %p118 = scmp.ne.s32.totalorder %s113, %s115
      %p119 = scmp.eq.s32.totalorder %s16, 0
      %p120 = por %p118, %p119
      %p121 = scmp.ne.s32.totalorder %s113, %s115
      %p122 = scmp.eq.s32.totalorder %s21, 1
      %p123 = por %p121, %p122
      %p124 = scmp.ne.s32.totalorder %s115, %s116
      %p125 = scmp.eq.s32.totalorder %s21, 0
      %p126 = por %p124, %p125
      %p127 = scmp.ne.s32.totalorder %s115, %s116
      %p128 = scmp.eq.s32.totalorder %s22, 1
      %p129 = por %p127, %p128
      %p131 = scmp.ne.s32.totalorder %s116, %s130
      %p132 = scmp.eq.s32.totalorder %s22, 0
      %p133 = por %p131, %p132
      %s135 = sadd.s32 %s134, 1
      %p138 = scmp.eq.s32.totalorder %s16, 1
      %p139 = scmp.ne.s32.totalorder %s134, %s136
      %p140 = scmp.eq.s32.totalorder %s16, 0
      %p141 = por %p139, %p140
      %p142 = scmp.ne.s32.totalorder %s134, %s136
      %p143 = scmp.eq.s32.totalorder %s21, 1
      %p144 = por %p142, %p143
      %p145 = scmp.ne.s32.totalorder %s136, %s137
      %p146 = scmp.eq.s32.totalorder %s21, 0
      %p147 = por %p145, %p146
      %p148 = scmp.ne.s32.totalorder %s136, %s137
      %p149 = scmp.eq.s32.totalorder %s22, 1
      %p150 = por %p148, %p149
      %p152 = scmp.ne.s32.totalorder %s137, %s151
      %p153 = scmp.eq.s32.totalorder %s22, 0
      %p154 = por %p152, %p153
      %s155 = ssub.s32 %s23, %s35
      %s156 = ssub.s32 %s24, %s31
      %s157 = sor.u32 %s155, %s156
      %p158 = scmp.eq.s32.totalorder %s157, 0
      %s160 = sadd.s32 %s159, 1
      %s161 = scalar_select %p158, %s159, %s160
      %p164 = pneg %p158
      %p165 = scmp.eq.s32.totalorder %s16, 1
      %p166 = por %p164, %p165
      %p167 = scmp.ne.s32.totalorder %s159, %s162
      %p168 = scmp.eq.s32.totalorder %s16, 0
      %p169 = por %p167, %p168
      %p170 = scmp.ne.s32.totalorder %s159, %s162
      %p171 = scmp.eq.s32.totalorder %s21, 1
      %p172 = por %p170, %p171
      %p173 = scmp.ne.s32.totalorder %s162, %s163
      %p174 = scmp.eq.s32.totalorder %s21, 0
      %p175 = por %p173, %p174
      %p176 = scmp.ne.s32.totalorder %s162, %s163
      %p177 = scmp.eq.s32.totalorder %s22, 1
      %p178 = por %p176, %p177
      %p180 = scmp.ne.s32.totalorder %s163, %s179
      %p181 = scmp.eq.s32.totalorder %s22, 0
      %p182 = por %p180, %p181
      %s183 = ssub.s32 %s23, %s35
      %s184 = ssub.s32 %s24, %s31
      %s185 = sor.u32 %s183, %s184
      %p186 = scmp.eq.s32.totalorder %s185, 0
      %s188 = sadd.s32 %s187, 1
      %s189 = scalar_select %p186, %s187, %s188
      %p192 = pneg %p186
      %p193 = scmp.eq.s32.totalorder %s16, 1
      %p194 = por %p192, %p193
      %p195 = scmp.ne.s32.totalorder %s187, %s190
      %p196 = scmp.eq.s32.totalorder %s16, 0
      %p197 = por %p195, %p196
      %p198 = scmp.ne.s32.totalorder %s187, %s190
      %p199 = scmp.eq.s32.totalorder %s21, 1
      %p200 = por %p198, %p199
      %p201 = scmp.ne.s32.totalorder %s190, %s191
      %p202 = scmp.eq.s32.totalorder %s21, 0
      %p203 = por %p201, %p202
      %p204 = scmp.ne.s32.totalorder %s190, %s191
      %p205 = scmp.eq.s32.totalorder %s22, 1
      %p206 = por %p204, %p205
      %p208 = scmp.ne.s32.totalorder %s191, %s207
      %p209 = scmp.eq.s32.totalorder %s22, 0
      %p210 = por %p208, %p209
      %p211 = scmp.le.s32.totalorder 1, %s16
      %p212 = scmp.lt.s32.totalorder %s16, 3
      %p213 = pnand %p211, %p212
      %p214 = pneg %p213
      // Predicated region
      $region9: #{tpu_custom_call.1} parent=5 // pred_check
        _
      $region10: #{tpu_custom_call.1} parent=5 // pred_check_branch
        %216 = sbr.rel (%p213) target = $region12
      $region11: #{tpu_custom_call.1} parent=5 // pred_region
        %s217 = ssub.s32 %s16, 1
        // Predicated region
        $region13: #{tpu_custom_call.1} parent=11 // pred_check
          %p218 = pneg %p105
        $region14: #{tpu_custom_call.1} parent=11 // pred_check_branch
          %220 = sbr.rel (%p218) target = $region16
        $region15: #{tpu_custom_call.1} parent=11 // pred_region
          _
        $region16: #{tpu_custom_call.1} parent=11 // pred_fallthru
          _
        // Predicated region
        $region17: #{tpu_custom_call.1} parent=11 // pred_check
          %p221 = pneg %p126
        $region18: #{tpu_custom_call.1} parent=11 // pred_check_branch
          %223 = sbr.rel (%p221) target = $region20
        $region19: #{tpu_custom_call.1} parent=11 // pred_region
          _
        $region20: #{tpu_custom_call.1} parent=11 // pred_fallthru
          _
        // Predicated region
        $region21: #{tpu_custom_call.1} parent=11 // pred_check
          %p224 = pneg %p147
        $region22: #{tpu_custom_call.1} parent=11 // pred_check_branch
          %226 = sbr.rel (%p224) target = $region24
        $region23: #{tpu_custom_call.1} parent=11 // pred_region
          _
        $region24: #{tpu_custom_call.1} parent=11 // pred_fallthru
          _
      $region12: #{tpu_custom_call.1} parent=5 // pred_fallthru
        _
      %p227 = scmp.lt.s32.totalorder %s16, 2
      // Predicated region
      $region25: #{tpu_custom_call.1} parent=5 // pred_check
        %p228 = pneg %p227
      $region26: #{tpu_custom_call.1} parent=5 // pred_check_branch
        %230 = sbr.rel (%p228) target = $region28
      $region27: #{tpu_custom_call.1} parent=5 // pred_region
        // Predicated region
        $region29: #{tpu_custom_call.1} parent=27 // pred_check
          %p231 = pneg %p50
        $region30: #{tpu_custom_call.1} parent=27 // pred_check_branch
          %233 = sbr.rel (%p231) target = $region32
        $region31: #{tpu_custom_call.1} parent=27 // pred_region
          %p234 = scmp.lt.s32.totalorder %s23, 1
          %s235 = scalar_select %p234, %s23, 1
          %p236 = scmp.lt.s32.totalorder %s24, 0
          %s237 = scalar_select %p236, %s24, 0
          %s238 = smul.addr %s235, 2
          %s239 = sadd.s32 %s237, %s238
          %s240 = smul.addr %s239, 8
          %s241 = scalar_lea.vmem %s0, %s240
        $region32: #{tpu_custom_call.1} parent=27 // pred_fallthru
          _
        // Predicated region
        $region33: #{tpu_custom_call.1} parent=27 // pred_check
          %p242 = pneg %p78
        $region34: #{tpu_custom_call.1} parent=27 // pred_check_branch
          %244 = sbr.rel (%p242) target = $region36
        $region35: #{tpu_custom_call.1} parent=27 // pred_region
          %p245 = scmp.lt.s32.totalorder %s23, 1
          %s246 = scalar_select %p245, %s23, 1
          %p247 = scmp.lt.s32.totalorder %s24, 0
          %s248 = scalar_select %p247, %s24, 0
          %s249 = smul.addr %s246, 4
          %s250 = sadd.s32 %s248, %s249
          %s251 = smul.addr %s250, 8
          %s252 = scalar_lea.vmem %s1, %s251
        $region36: #{tpu_custom_call.1} parent=27 // pred_fallthru
          _
      $region28: #{tpu_custom_call.1} parent=5 // pred_fallthru
        _
      %p253 = scmp.le.s32.totalorder 1, %s16
      %p254 = scmp.lt.s32.totalorder %s16, 3
      %p255 = pnand %p253, %p254
      %p256 = pneg %p255
      // Predicated region
      $region37: #{tpu_custom_call.1} parent=5 // pred_check
        _
      $region38: #{tpu_custom_call.1} parent=5 // pred_check_branch
        %258 = sbr.rel (%p255) target = $region40
      $region39: #{tpu_custom_call.1} parent=5 // pred_region
        %s259 = ssub.s32 %s16, 1
        %p260 = scmp.lt.s32.totalorder %s25, 1
        %s261 = scalar_select %p260, %s25, 1
        %p262 = scmp.lt.s32.totalorder %s26, 0
        %s263 = scalar_select %p262, %s26, 0
        %s264 = smul.addr %s261, 2
        %s265 = sadd.s32 %s263, %s264
        %s266 = smul.addr %s265, 8
        %s267 = scalar_lea.vmem %s0, %s266
        %p268 = pneg %p56
        %p269 = pneg %p53
        %p270 = scmp.lt.s32.totalorder %s25, 1
        %s271 = scalar_select %p270, %s25, 1
        %p272 = scmp.lt.s32.totalorder %s26, 0
        %s273 = scalar_select %p272, %s26, 0
        %s274 = smul.addr %s271, 4
        %s275 = sadd.s32 %s273, %s274
        %s276 = smul.addr %s275, 8
        %s277 = scalar_lea.vmem %s1, %s276
        %p278 = pneg %p84
        %p279 = pneg %p81
        %p280 = pneg %p105
        %p281 = pneg %p102
        %p282 = pneg %p126
        %p283 = pneg %p123
        %p284 = pneg %p147
        %p285 = pneg %p144
        %p286 = pneg %p175
        %p287 = pneg %p172
        %p288 = scmp.lt.s32.totalorder %s25, 1
        %s289 = scalar_select %p288, %s25, 1
        %p290 = scmp.lt.s32.totalorder %s26, 0
        %s291 = scalar_select %p290, %s26, 0
        %s292 = smul.addr %s289, 2
        %s293 = sadd.s32 %s291, %s292
        %s294 = smul.addr %s293, 8
        %s295 = scalar_lea.vmem %s5, %s294
        %p296 = pneg %p203
        %p297 = pneg %p200
        %s298 = sand.u32 %s190, 1
        %s299 = scalar_lea.sflag [#allocation3], %s298
        %s300 = sand.u32 %s190, 1
        %s301 = smul.addr %s300, 32
        %s302 = scalar_lea.vmem [#allocation2], %s301
        %p303 = scmp.lt.s32.totalorder %s25, 1
        %s304 = scalar_select %p303, %s25, 1
        %p305 = scmp.lt.s32.totalorder %s26, 0
        %s306 = scalar_select %p305, %s26, 0
        %s307 = smul.addr %s304, 2
        %s308 = sadd.s32 %s306, %s307
        %s309 = smul.addr %s308, 8
        %s310 = scalar_lea.vmem %s0, %s309
        %p311 = scmp.lt.s32.totalorder %s25, 1
        %s312 = scalar_select %p311, %s25, 1
        %p313 = scmp.lt.s32.totalorder %s26, 0
        %s314 = scalar_select %p313, %s26, 0
        %s315 = smul.addr %s312, 4
        %s316 = sadd.s32 %s314, %s315
        %s317 = smul.addr %s316, 8
        %s318 = scalar_lea.vmem %s1, %s317
        %p319 = scmp.lt.s32.totalorder %s25, 1
        %s320 = scalar_select %p319, %s25, 1
        %p321 = scmp.lt.s32.totalorder %s26, 0
        %s322 = scalar_select %p321, %s26, 0
        %s323 = smul.addr %s320, 2
        %s324 = sadd.s32 %s322, %s323
        %s325 = smul.addr %s324, 8
        %s326 = scalar_lea.vmem %s5, %s325
        %v327 = vld [vmem:[%s310] sm:$0xff]
        %v328 = vld [vmem:[%s310 + $0x8] sm:$0xf]
        %v329 = vld [vmem:[%s2] sm:$0xff]
        %v330 = vld [vmem:[%s2 + $0x8] sm:$0xf]
        %vm331 = vcmask 97280
        %v333 = vsel %vm331, %v329, 0
        %v336 = vsel %vm331, %v330, 0
        %vm338 = vcmask 1043456
        %v340 = vsel %vm338, %v328, 0
        %342 = vmatprep.subr.mxu0 0.0
        %343 = vmatpush1.msra.mxu0 0.0
        %344 = vmatprep.subr.mxu0 0.0
        %345 = vmatpush1.msra.mxu0 0.0
        %346 = vmatprep.subr.mxu0 0.0
        %347 = vmatpush1.msra.mxu0 0.0
        %348 = vmatprep.subr.mxu0 0.0
        %349 = vmatpush1.msra.mxu0 0.0
        %350 = vmatprep.subr.mxu0 0.0
        %351 = vmatpush1.msra.mxu0 0.0
        %352 = vmatprep.subr.mxu0 0.0
        %353 = vmatpush1.msra.mxu0 0.0
        %354 = vmatprep.subr.mxu0 0.0
        %355 = vmatpush1.msra.mxu0 0.0
        %356 = vmatprep.subr.mxu0 0.0
        %357 = vmatpush1.msra.mxu0 0.0
        %358 = vmatprep.subr.mxu0 0.0
        %359 = vmatpush1.msra.mxu0 0.0
        %360 = vmatprep.subr.mxu0 0.0
        %361 = vmatpush1.msra.mxu0 0.0
        %362 = vmatprep.subr.mxu0 0.0
        %363 = vmatpush1.msra.mxu0 0.0
        %364 = vmatprep.subr.mxu0 0.0
        %365 = vmatpush1.msra.mxu0 0.0
        %366 = vmatprep.subr.mxu0 0.0
        %367 = vmatpush1.msra.mxu0 0.0
        %368 = vmatprep.subr.mxu0 0.0
        %369 = vmatpush1.msra.mxu0 0.0
        %370 = vmatprep.subr.mxu0 0.0
        %371 = vmatpush1.msra.mxu0 %v340
        %372 = vmatprep.subr.mxu0 0.0
        %373 = vmatpush1.msra.mxu0 %v327
        %374 = vmatprep.subr.mxu0 0.0
        %375 = vmatpush2.msra.mxu0 0.0
        %376 = vmatprep.subr.mxu0 0.0
        %377 = vmatpush2.msra.mxu0 0.0
        %378 = vmatprep.subr.mxu0 0.0
        %379 = vmatpush2.msra.mxu0 0.0
        %380 = vmatprep.subr.mxu0 0.0
        %381 = vmatpush2.msra.mxu0 0.0
        %382 = vmatprep.subr.mxu0 0.0
        %383 = vmatpush2.msra.mxu0 0.0
        %384 = vmatprep.subr.mxu0 0.0
        %385 = vmatpush2.msra.mxu0 0.0
        %386 = vmatprep.subr.mxu0 0.0
        %387 = vmatpush2.msra.mxu0 0.0
        %388 = vmatprep.subr.mxu0 0.0
        %389 = vmatpush2.msra.mxu0 0.0
        %390 = vmatprep.subr.mxu0 0.0
        %391 = vmatpush2.msra.mxu0 0.0
        %392 = vmatprep.subr.mxu0 0.0
        %393 = vmatpush2.msra.mxu0 0.0
        %394 = vmatprep.subr.mxu0 0.0
        %395 = vmatpush2.msra.mxu0 0.0
        %396 = vmatprep.subr.mxu0 0.0
        %397 = vmatpush2.msra.mxu0 0.0
        %398 = vmatprep.subr.mxu0 0.0
        %399 = vmatpush2.msra.mxu0 0.0
        %400 = vmatprep.subr.mxu0 0.0
        %401 = vmatpush2.msra.mxu0 0.0
        %402 = vmatprep.subr.mxu0 0.0
        %403 = vmatpush2.msra.mxu0 0.0
        %404 = vmatprep.subr.mxu0 0.0
        %405 = vmatpush2.msra.mxu0 0.0
        %406 = vmatprep.mubr.f32.mxu0 0.0
        %407 = vmatmul.mubr.f32.gmra.mxu0 %v333
        %v408 = vpop.f32.mrf.mxu0
        %v409 = vadd.f32 0.0, %v408
        %v410 = vpop.f32.mrf.mxu0
        %411 = vmatprep.mubr.f32.mxu0 0.0
        %412 = vmatmul.mubr.f32.gmra.mxu0 %v336
        %v413 = vpop.f32.mrf.mxu0
        %v414 = vadd.f32 0.0, %v413
        %v415 = vpop.f32.mrf.mxu0
        %416 = vdwg.mxu0
        %vm417 = vcmask 523264
        %418 = vst.msk [vmem:[%s326] sm:$0xff] %vm417, %v409
        %vm419 = vcmask 519168
        %420 = vst.msk [vmem:[%s326 + $0x8] sm:$0xf] %vm419, %v414
        %v421 = vld [vmem:[%s3] sm:$0xff]
        %v422 = vld [vmem:[%s3 + $0x8] sm:$0xff]
        %v423 = vld [vmem:[%s3 + $0x10] sm:$0xff]
        %v424 = vld [vmem:[%s3 + $0x18] sm:$0xff]
        %v425 = vld [vmem:[%s4] sm:$0xff]
        %v426 = vld [vmem:[%s4 + $0x8] sm:$0xff]
        %v427 = vld [vmem:[%s4 + $0x10] sm:$0xff]
        %v428 = vld [vmem:[%s4 + $0x18] sm:$0xff]
        %430 = vset.pattern.permute.xlu0 0
        %431 = vperm.xlu0 %430, %v425
        %v432 = vpop.permute.xlu0 %431
        %435 = vset.pattern.permute.xlu0 0
        %436 = vperm.xlu0 %435, %v426
        %v437 = vpop.permute.xlu0 %436
        %440 = vset.pattern.permute.xlu0 0
        %441 = vperm.xlu0 %440, %v427
        %v442 = vpop.permute.xlu0 %441
        %445 = vset.pattern.permute.xlu0 0
        %446 = vperm.xlu0 %445, %v428
        %v447 = vpop.permute.xlu0 %446
        %v450 = vsel %vm331, %v421, 0
        %v453 = vsel %vm331, %v422, 0
        %v456 = vsel %vm331, %v423, 0
        %v459 = vsel %vm331, %v424, 0
        %461 = vmatprep.subr.mxu0 0.0
        %462 = vmatpush1.msra.mxu0 0.0
        %463 = vmatprep.subr.mxu0 0.0
        %464 = vmatpush1.msra.mxu0 0.0
        %465 = vmatprep.subr.mxu0 0.0
        %466 = vmatpush1.msra.mxu0 0.0
        %467 = vmatprep.subr.mxu0 0.0
        %468 = vmatpush1.msra.mxu0 0.0
        %469 = vmatprep.subr.mxu0 0.0
        %470 = vmatpush1.msra.mxu0 0.0
        %471 = vmatprep.subr.mxu0 0.0
        %472 = vmatpush1.msra.mxu0 0.0
        %473 = vmatprep.subr.mxu0 0.0
        %474 = vmatpush1.msra.mxu0 0.0
        %475 = vmatprep.subr.mxu0 0.0
        %476 = vmatpush1.msra.mxu0 0.0
        %477 = vmatprep.subr.mxu0 0.0
        %478 = vmatpush1.msra.mxu0 0.0
        %479 = vmatprep.subr.mxu0 0.0
        %480 = vmatpush1.msra.mxu0 0.0
        %481 = vmatprep.subr.mxu0 0.0
        %482 = vmatpush1.msra.mxu0 0.0
        %483 = vmatprep.subr.mxu0 0.0
        %484 = vmatpush1.msra.mxu0 0.0
        %485 = vmatprep.subr.mxu0 0.0
        %486 = vmatpush1.msra.mxu0 0.0
        %487 = vmatprep.subr.mxu0 0.0
        %488 = vmatpush1.msra.mxu0 0.0
        %489 = vmatprep.subr.mxu0 0.0
        %490 = vmatpush1.msra.mxu0 %v340
        %491 = vmatprep.subr.mxu0 0.0
        %492 = vmatpush1.msra.mxu0 %v327
        %493 = vmatprep.subr.mxu0 0.0
        %494 = vmatpush2.msra.mxu0 0.0
        %495 = vmatprep.subr.mxu0 0.0
        %496 = vmatpush2.msra.mxu0 0.0
        %497 = vmatprep.subr.mxu0 0.0
        %498 = vmatpush2.msra.mxu0 0.0
        %499 = vmatprep.subr.mxu0 0.0
        %500 = vmatpush2.msra.mxu0 0.0
        %501 = vmatprep.subr.mxu0 0.0
        %502 = vmatpush2.msra.mxu0 0.0
        %503 = vmatprep.subr.mxu0 0.0
        %504 = vmatpush2.msra.mxu0 0.0
        %505 = vmatprep.subr.mxu0 0.0
        %506 = vmatpush2.msra.mxu0 0.0
        %507 = vmatprep.subr.mxu0 0.0
        %508 = vmatpush2.msra.mxu0 0.0
        %509 = vmatprep.subr.mxu0 0.0
        %510 = vmatpush2.msra.mxu0 0.0
        %511 = vmatprep.subr.mxu0 0.0
        %512 = vmatpush2.msra.mxu0 0.0
        %513 = vmatprep.subr.mxu0 0.0
        %514 = vmatpush2.msra.mxu0 0.0
        %515 = vmatprep.subr.mxu0 0.0
        %516 = vmatpush2.msra.mxu0 0.0
        %517 = vmatprep.subr.mxu0 0.0
        %518 = vmatpush2.msra.mxu0 0.0
        %519 = vmatprep.subr.mxu0 0.0
        %520 = vmatpush2.msra.mxu0 0.0
        %521 = vmatprep.subr.mxu0 0.0
        %522 = vmatpush2.msra.mxu0 0.0
        %523 = vmatprep.subr.mxu0 0.0
        %524 = vmatpush2.msra.mxu0 0.0
        %525 = vmatprep.mubr.f32.mxu0 0.0
        %526 = vmatmul.mubr.f32.gmra.mxu0 %v450
        %v527 = vpop.f32.mrf.mxu0
        %v528 = vadd.f32 %v432, %v527
        %v529 = vpop.f32.mrf.mxu0
        %530 = vmatprep.mubr.f32.mxu0 0.0
        %531 = vmatmul.mubr.f32.gmra.mxu0 %v453
        %v532 = vpop.f32.mrf.mxu0
        %v533 = vadd.f32 %v437, %v532
        %v534 = vpop.f32.mrf.mxu0
        %535 = vmatprep.mubr.f32.mxu0 0.0
        %536 = vmatmul.mubr.f32.gmra.mxu0 %v456
        %v537 = vpop.f32.mrf.mxu0
        %v538 = vadd.f32 %v442, %v537
        %v539 = vpop.f32.mrf.mxu0
        %540 = vmatprep.mubr.f32.mxu0 0.0
        %541 = vmatmul.mubr.f32.gmra.mxu0 %v459
        %v542 = vpop.f32.mrf.mxu0
        %v543 = vadd.f32 %v447, %v542
        %v544 = vpop.f32.mrf.mxu0
        %545 = vdwg.mxu0
        %v546 = vld [vmem:[%s318] sm:$0xff]
        %v547 = vld [vmem:[%s318 + $0x8] sm:$0xff]
        %v548 = vld [vmem:[%s318 + $0x10] sm:$0xff]
        %v549 = vld [vmem:[%s318 + $0x18] sm:$0xff]
        %v550 = vadd.f32 %v528, %v546
        %v551 = vadd.f32 %v533, %v547
        %v552 = vadd.f32 %v538, %v548
        %v553 = vadd.f32 %v543, %v549
        %554 = vst.msk [vmem:[%s302] sm:$0xff] %vm417, %v550
        %555 = vst.msk [vmem:[%s302 + $0x8] sm:$0xff] %vm417, %v551
        %556 = vst.msk [vmem:[%s302 + $0x10] sm:$0xff] %vm417, %v552
        %557 = vst.msk [vmem:[%s302 + $0x18] sm:$0xff] %vm417, %v553
        %p558 = scmp.lt.s32.totalorder %s25, 1
        %s559 = scalar_select %p558, %s25, 1
        %p560 = scmp.lt.s32.totalorder %s26, 0
        %s561 = scalar_select %p560, %s26, 0
        %s562 = smul.addr %s559, 2
        %s563 = sadd.s32 %s561, %s562
        %s564 = smul.addr %s563, 8
        %s565 = scalar_lea.vmem %s5, %s564
        %s566 = sand.u32 %s190, 1
        %s567 = scalar_lea.sflag [#allocation3], %s566
        %s568 = sand.u32 %s190, 1
        %s569 = smul.addr %s568, 32
        %s570 = scalar_lea.vmem [#allocation2], %s569
        // Predicated region
        $region41: #{tpu_custom_call.1} parent=39 // pred_check
          %p571 = pneg %p172
        $region42: #{tpu_custom_call.1} parent=39 // pred_check_branch
          %573 = sbr.rel (%p571) target = $region44
        $region43: #{tpu_custom_call.1} parent=39 // pred_region
          _
        $region44: #{tpu_custom_call.1} parent=39 // pred_fallthru
          _
        // Predicated region
        $region45: #{tpu_custom_call.1} parent=39 // pred_check
          %p574 = pneg %p200
        $region46: #{tpu_custom_call.1} parent=39 // pred_check_branch
          %576 = sbr.rel (%p574) target = $region48
        $region47: #{tpu_custom_call.1} parent=39 // pred_region
          %s578 = ssub.s32 512, 512
          %579 = vsyncadd %s567, %s578
          %s580 = smul.addr %s25, 4
          %s581 = sadd.s32 %s26, %s580
          %s582 = smul.addr %s581, 128
          %s583 = scalar_lea.hbm %s6, %s582
          %s584 = sshll.u32 %s570, 4
          %s585 = int_to_ptr.vmem [resolvable:$true] %s584
          %590 = dma.vmem_to_hbm [thread:$0]  %s585, 512, %s583, %s567, 128, 128, 8
        $region48: #{tpu_custom_call.1} parent=39 // pred_fallthru
          _
      $region40: #{tpu_custom_call.1} parent=5 // pred_fallthru
        _
      %p591 = scmp.le.s32.totalorder 2, %s16
      // Predicated region
      $region49: #{tpu_custom_call.1} parent=5 // pred_check
        %p592 = pneg %p591
      $region50: #{tpu_custom_call.1} parent=5 // pred_check_branch
        %594 = sbr.rel (%p592) target = $region52
      $region51: #{tpu_custom_call.1} parent=5 // pred_region
        %s595 = ssub.s32 %s16, 2
        // Predicated region
        $region53: #{tpu_custom_call.1} parent=51 // pred_check
          %p596 = pneg %p178
        $region54: #{tpu_custom_call.1} parent=51 // pred_check_branch
          %598 = sbr.rel (%p596) target = $region56
        $region55: #{tpu_custom_call.1} parent=51 // pred_region
          %p599 = scmp.lt.s32.totalorder %s27, 1
          %s600 = scalar_select %p599, %s27, 1
          %p601 = scmp.lt.s32.totalorder %s28, 0
          %s602 = scalar_select %p601, %s28, 0
          %s603 = smul.addr %s600, 2
          %s604 = sadd.s32 %s602, %s603
          %s605 = smul.addr %s604, 8
          %s606 = scalar_lea.vmem %s5, %s605
        $region56: #{tpu_custom_call.1} parent=51 // pred_fallthru
          _
        // Predicated region
        $region57: #{tpu_custom_call.1} parent=51 // pred_check
          %p607 = pneg %p206
        $region58: #{tpu_custom_call.1} parent=51 // pred_check_branch
          %609 = sbr.rel (%p607) target = $region60
        $region59: #{tpu_custom_call.1} parent=51 // pred_region
          %s610 = sand.u32 %s191, 1
          %s611 = scalar_lea.sflag [#allocation3], %s610
          %s612 = sand.u32 %s191, 1
          %s613 = smul.addr %s612, 32
          %s614 = scalar_lea.vmem [#allocation2], %s613
          %615 = dma.done %s611, 512
        $region60: #{tpu_custom_call.1} parent=51 // pred_fallthru
          _
      $region52: #{tpu_custom_call.1} parent=5 // pred_fallthru
        _
    $region6: #{tpu_custom_call.1} parent=1 // loop_footer
      %s20 = sadd.s32 1, %s16
    $region7: #{tpu_custom_call.1} parent=1 // loop_footer_branch
      %15 = sbr.rel target = $region3
    $region8: #{tpu_custom_call.1} parent=1 // loop_exit
      _
    %616 = vsyncpa [#allocation3], 1
    %s617 = scalar_lea.sflag [#allocation3], 1
    %618 = vsyncpa %s617, 1

</llo_original>
